<compile_context>
chip_gen: v7x
topology: tpu7x:2x2x1
jax: 0.10.0
libtpu: 0.0.40
codegen_flags: <defaults>
</compile_context>

<pallas_src>
import jax
import jax.numpy as jnp
from jax.experimental import pallas as pl
from jax.experimental.pallas import tpu as pltpu


_SUB_TEMP_BYTES = 1 << 20    # target size of per-sub-chunk VPU temporaries
_HEADROOM_BYTES = 4 << 20    # compiler scratch + strip-mined temporaries


def _vmem_budget():
    """Generation-aware (x-block target bytes, vmem_limit cap)."""
    cap = 64 << 20
    try:
        cap = int(getattr(pltpu.get_tpu_info(), "vmem_capacity_bytes", cap))
    except Exception:
        pass
    if cap > (64 << 20):             # v5e / v6e: 128 MiB physical VMEM
        return 28 << 20, 96 << 20
    return 14 << 20, 48 << 20        # v7x (or unknown): 64 MiB physical VMEM


def _row_block_candidates(nt, max_rows):
    limit = min(nt, max_rows)
    cands = [d for d in range(8, limit + 1, 8) if nt % d == 0]
    if not cands and nt <= max_rows:
        cands = [nt]                 # full-dim row block is always layout-legal
    return cands


def _prefer_rows(cands, nt):
    """Largest candidate with an even row-block count (v7x megacore balance),
    else largest giving >= 2 blocks, else largest."""
    even = [d for d in cands if (nt // d) % 2 == 0]
    if even:
        return max(even)
    multi = [d for d in cands if nt // d >= 2]
    if multi:
        return max(multi)
    return max(cands)


def _block_vmem_bytes(r, kt):
    x_b = 2 * r * kt * 4                        # double-buffered x blocks
    w_b = 2 * kt * 4                            # double-buffered w block
    io_b = 4 * ((r + 7) // 8) * 8 * 128 * 4     # out (x2) + acc, tile-padded
    return x_b + w_b + io_b + _HEADROOM_BYTES


def _choose_tiling(nt, k_total, target_bytes, cap_bytes):
    """Prefer full-K blocks; only tile K when the smallest legal row block
    would not fit the per-generation VMEM budget."""
    max_rows = max(8, (target_bytes // 4) // max(k_total, 1))
    cands = _row_block_candidates(nt, max_rows)
    full_ok = [d for d in cands if _block_vmem_bytes(d, k_total) <= cap_bytes]
    if full_ok:
        return _prefer_rows(full_ok, nt), k_total

    r_min = 8 if (nt >= 8 and nt % 8 == 0) else nt
    kt = None
    d = 128
    while d <= k_total // 2:
        if k_total % d == 0 and _block_vmem_bytes(r_min, d) <= cap_bytes:
            kt = d
        d += 128
    if kt is None:
        kt = k_total   # no multiple-of-128 divisor fits: accept full-K at min rows
    return r_min, kt


def _pooled_conv_kernel(x_ref, w_ref, o_ref, acc_ref):
    # x_ref : (R, Kt)  R frames x one tile of the fused C*HW axis (streamed once)
    # w_ref : (1, Kt)  fused conv/pool weights (conv_w[c] / HW), lane-dense
    # o_ref : (R, 1)   pooled conv value per frame
    # acc_ref: (R, 1)  f32 running sum across the (usually trivial) K grid axis
    r, kt = x_ref.shape
    k = pl.program_id(1)

    @pl.when(k == 0)
    def _init():
        acc_ref[...] = jnp.zeros_like(acc_ref)

    # Strip-mine the weighted row-sum over lane-aligned sub-chunks so VPU
    # temporaries stay ~1 MiB regardless of how large the (DMA-sized) block is.
    if kt >= 256:
        sub = ((_SUB_TEMP_BYTES // 4) // max(r, 1)) // 128 * 128
        sub = min(max(sub, 128), (kt // 128) * 128)
        n_full, tail = kt // sub, kt % sub
    else:
        sub, n_full, tail = kt, 0, kt

    def body(j, acc):
        s = pl.multiple_of(j * sub, sub)
        xs = x_ref[:, pl.ds(s, sub)]
        ws = w_ref[:, pl.ds(s, sub)]
        return acc + jnp.sum(xs * ws, axis=1, keepdims=True)

    acc = jnp.zeros((r, 1), jnp.float32)
    if n_full > 0:
        acc = jax.lax.fori_loop(0, n_full, body, acc, unroll=(n_full <= 8))
    if tail > 0:
        xs = x_ref[:, n_full * sub:]
        ws = w_ref[:, n_full * sub:]
        acc = acc + jnp.sum(xs * ws, axis=1, keepdims=True)

    acc_ref[...] += acc

    @pl.when(k == pl.num_programs(1) - 1)
    def _finalize():
        o_ref[...] = acc_ref[...].astype(o_ref.dtype)


def af_layer_basic_2d(x, conv_w, conv_b, fc1_w, fc2_w, segment):
    """x: (nt, C, H, W) float32, NCHW like PyTorch. Returns (nt//segment, segment)."""
    nt, C, H, W = x.shape
    assert nt % segment == 0, "nt must be a multiple of segment"
    b_batch = nt // segment
    hw = H * W
    k_total = C * hw

    # Lane-dense 2D view of x; fused conv+pool weight row over the C*HW axis.
    x2 = x.reshape(nt, k_total)
    if x2.dtype != jnp.float32:
        x2 = x2.astype(jnp.float32)   # no-op / no HBM copy when x is already f32
    w_full = jnp.broadcast_to(
        conv_w.reshape(C, 1).astype(jnp.float32) / float(hw), (C, hw)
    ).reshape(1, k_total)

    target_bytes, cap_bytes = _vmem_budget()
    R, Kt = _choose_tiling(nt, k_total, target_bytes, cap_bytes)
    grid = (nt // R, k_total // Kt)
    vmem_limit = int(min(max(_block_vmem_bytes(R, Kt), 16 << 20), cap_bytes))

    pooled = pl.pallas_call(
        _pooled_conv_kernel,
        out_shape=jax.ShapeDtypeStruct((nt, 1), jnp.float32),
        grid_spec=pltpu.PrefetchScalarGridSpec(
            num_scalar_prefetch=0,
            grid=grid,
            in_specs=[
                pl.BlockSpec((R, Kt), lambda i, k: (i, k)),
                pl.BlockSpec((1, Kt), lambda i, k: (0, k)),
            ],
            out_specs=pl.BlockSpec((R, 1), lambda i, k: (i, 0)),
            scratch_shapes=[pltpu.VMEM((R, 1), jnp.float32)],
        ),
        compiler_params=pltpu.CompilerParams(
            dimension_semantics=("parallel", "arbitrary"),
            vmem_limit_bytes=vmem_limit,
        ),
    )(x2, w_full)

    # Tiny per-group head (conv bias + 2-layer MLP + softmax), hoisted out of
    # the kernel into plain JAX (a few hundred FLOPs total).
    # Note: the module's conv has a single output channel, hence a scalar bias.
    y = pooled.reshape(b_batch, segment) + conv_b.reshape(-1)[0].astype(jnp.float32)
    h = jnp.maximum(y @ fc1_w.T.astype(jnp.float32), 0.0)
    z = h @ fc2_w.T.astype(jnp.float32)
    return jax.nn.softmax(z, axis=1)


if __name__ == "__main__":
    # Small shapes consistent with the module: segment=4, in_channels=32.
    segment, in_channels = 4, 32
    b_batch, H, W = 4, 16, 16
    nt = b_batch * segment

    key = jax.random.PRNGKey(0)
    kx, kcw, kcb, k1, k2 = jax.random.split(key, 5)
    x = jax.random.normal(kx, (nt, in_channels, H, W), dtype=jnp.float32)

    # Deterministic synthetic parameters (shapes from the module __init__).
    conv_w = 0.1 * jax.random.normal(kcw, (1, in_channels, 1, 1), jnp.float32)
    conv_b = 0.1 * jax.random.normal(kcb, (1,), jnp.float32)
    fc1_w = 0.5 * jax.random.normal(k1, (segment // 2, segment), jnp.float32)
    fc2_w = 0.5 * jax.random.normal(k2, (segment, segment // 2), jnp.float32)

    y = af_layer_basic_2d(x, conv_w, conv_b, fc1_w, fc2_w, segment)
    y = jax.block_until_ready(y)

    # Pure-JAX reference mirroring the PyTorch forward exactly.
    xm = x.mean(axis=(2, 3))                                    # (nt, C)
    yr = (xm @ conv_w.reshape(in_channels) + conv_b[0]).reshape(b_batch, segment)
    hr = jnp.maximum(yr @ fc1_w.T, 0.0)
    zr = hr @ fc2_w.T
    ref = jax.nn.softmax(zr, axis=1)

    assert y.shape == (b_batch, segment)
    assert jnp.allclose(y, ref, atol=1e-5, rtol=1e-5), (
        f"max abs err {jnp.max(jnp.abs(y - ref))}")
    print("KERNEL_OK")
</pallas_src>

<mosaic_0001>
module attributes {stable_mosaic.version = 11 : i64} {
  func.func @_pooled_conv_kernel(%arg0: i32, %arg1: i32, %arg2: memref<8x8192xf32, #tpu.memory_space<vmem>>, %arg3: memref<1x8192xf32, #tpu.memory_space<vmem>>, %arg4: memref<8x1xf32, #tpu.memory_space<vmem>>, %arg5: memref<8x1xf32, #tpu.memory_space<vmem>>) attributes {dimension_semantics = [#tpu.dimension_semantics<parallel>, #tpu.dimension_semantics<arbitrary>], iteration_bounds = array<i64: 2, 1>, scalar_prefetch = 0 : i64, scratch_operands = 1 : i64, tpu.core_type = #tpu.core_type<tc>, window_params = [{transform_indices = @transform_0, window_bounds = array<i64: 8, 8192>}, {transform_indices = @transform_1, window_bounds = array<i64: 1, 8192>}, {transform_indices = @transform_2, window_bounds = array<i64: 8, 1>}]} {
    %c0_i32 = arith.constant 0 : i32
    %0 = arith.cmpi eq, %arg1, %c0_i32 : i32
    %1 = arith.extui %0 : i1 to i32
    %c0_i32_0 = arith.constant 0 : i32
    %2 = arith.cmpi ne, %1, %c0_i32_0 : i32
    scf.if %2 {
      %cst_10 = arith.constant 0.000000e+00 : f32
      %21 = vector.broadcast %cst_10 : f32 to vector<8x1xf32>
      %c0_11 = arith.constant 0 : index
      %c0_12 = arith.constant 0 : index
      %22 = vector.load %arg5[%c0_11, %c0_12] : memref<8x1xf32, #tpu.memory_space<vmem>>, vector<8x1xf32>
      tpu.vector_store %arg5[%c0_11, %c0_12], %21 {strides = array<i32>} : memref<8x1xf32, #tpu.memory_space<vmem>>, vector<8x1xf32>,
    } else {
    }
    %cst = arith.constant 0.000000e+00 : f32
    %3 = vector.broadcast %cst : f32 to vector<8x1xf32>
    %c0_i32_1 = arith.constant 0 : i32
    %c8192_i32 = arith.constant 8192 : i32
    %4 = arith.muli %c0_i32_1, %c8192_i32 : i32
    %5 = tpu.assume_multiple %4, 8192 : i32
    %c0 = arith.constant 0 : index
    %6 = arith.index_cast %5 : i32 to index
    %7 = vector.load %arg2[%c0, %6] : memref<8x8192xf32, #tpu.memory_space<vmem>>, vector<8x8192xf32>
    %c0_2 = arith.constant 0 : index
    %8 = arith.index_cast %5 : i32 to index
    %9 = vector.load %arg3[%c0_2, %8] : memref<1x8192xf32, #tpu.memory_space<vmem>>, vector<1x8192xf32>
    %10 = vector.broadcast %9 : vector<1x8192xf32> to vector<8x8192xf32>
    %11 = arith.mulf %7, %10 : vector<8x8192xf32>
    %cst_3 = arith.constant dense<0.000000e+00> : vector<8xf32>
    %12 = vector.multi_reduction <add>, %11, %cst_3 [1] : vector<8x8192xf32> to vector<8xf32>
    %13 = vector.shape_cast %12 : vector<8xf32> to vector<8x1xf32>
    %14 = arith.addf %3, %13 : vector<8x1xf32>
    %c1_i32 = arith.constant 1 : i32
    %c0_4 = arith.constant 0 : index
    %c0_5 = arith.constant 0 : index
    %15 = vector.load %arg5[%c0_4, %c0_5] : memref<8x1xf32, #tpu.memory_space<vmem>>, vector<8x1xf32>
    %16 = arith.addf %15, %14 : vector<8x1xf32>
    %c0_6 = arith.constant 0 : index
    %c0_7 = arith.constant 0 : index
    %17 = vector.load %arg5[%c0_6, %c0_7] : memref<8x1xf32, #tpu.memory_space<vmem>>, vector<8x1xf32>
    tpu.vector_store %arg5[%c0_6, %c0_7], %16 {strides = array<i32>} : memref<8x1xf32, #tpu.memory_space<vmem>>, vector<8x1xf32>,
    %c0_i32_8 = arith.constant 0 : i32
    %18 = arith.cmpi eq, %arg1, %c0_i32_8 : i32
    %19 = arith.extui %18 : i1 to i32
    %c0_i32_9 = arith.constant 0 : i32
    %20 = arith.cmpi ne, %19, %c0_i32_9 : i32
    scf.if %20 {
      %c0_10 = arith.constant 0 : index
      %c0_11 = arith.constant 0 : index
      %21 = vector.load %arg5[%c0_10, %c0_11] : memref<8x1xf32, #tpu.memory_space<vmem>>, vector<8x1xf32>
      %c0_12 = arith.constant 0 : index
      %c0_13 = arith.constant 0 : index
      %22 = vector.load %arg4[%c0_12, %c0_13] : memref<8x1xf32, #tpu.memory_space<vmem>>, vector<8x1xf32>
      tpu.vector_store %arg4[%c0_12, %c0_13], %21 {strides = array<i32>} : memref<8x1xf32, #tpu.memory_space<vmem>>, vector<8x1xf32>,
    } else {
    }
    return
  }
  func.func @transform_0(%arg0: i32, %arg1: i32) -> (i32, i32) {
    %c0_i32 = arith.constant 0 : i32
    return %arg0, %arg1 : i32, i32
  }
  func.func @transform_1(%arg0: i32, %arg1: i32) -> (i32, i32) {
    %c0_i32 = arith.constant 0 : i32
    %c0_i32_0 = arith.constant 0 : i32
    return %c0_i32, %arg1 : i32, i32
  }
  func.func @transform_2(%arg0: i32, %arg1: i32) -> (i32, i32) {
    %c0_i32 = arith.constant 0 : i32
    %c0_i32_0 = arith.constant 0 : i32
    return %arg0, %c0_i32 : i32, i32
  }
}

</mosaic_0001>

<llo_original>
// kernel: tpu_custom_call.1
$region0: #{tpu_custom_call.1}
  #allocation0 [shape = 'u32[]', space=smem, size = 0x4, offset = 0x4, fixed_abs, tag = 'smem constant byte address 0x4 - core index']
  #allocation1 [shape = 'u32[144,128]{1,0:T(1,128)}', space=vmem, size = 0x12000, scoped, tag = 'internal scratch']
  #allocation2 [shape = 'f32[8,1]{1,0:T(8,128)}', space=vmem, size = 0x1000, scoped, tag = 'scratch operand']
  %s0 = inlined_call_operand.hbm [shape: f32[16,8192], index: 0, kind: input, shape index: {}]
  %s1 = inlined_call_operand.hbm [shape: f32[1,8192], index: 1, kind: input, shape index: {}]
  %s2 = inlined_call_operand.vmem [shape: f32[16,1], index: 2, kind: output, shape index: {}]
  %s3 = sld [smem:[#allocation0]]
  $region57: #{tpu_custom_call.1} parent=0
    _
  %s5 = ssub.s32 1, %s3
  %s6 = scalar_select 0, %s5, %s3
  $region1: #{tpu_custom_call.1} parent=0
    #allocation3 [shape = 'u8[524288]{0}', space=vmem, size = 0x80000, scoped, tag = 'input window, operand 0']
    #allocation4 [shape = 's32[2]{0}', space=sflag, size = 0x8, scoped, tag = 'scoped memory for tpu_custom_call.1']
    #allocation5 [shape = 'u8[32768]{0}', space=vmem, size = 0x8000, scoped, tag = 'input window, operand 1, single buffered']
    #allocation6 [shape = 's32[1]{0}', space=sflag, size = 0x4, scoped, tag = 'scoped memory for tpu_custom_call.1']
    %7 = vsyncpa [#allocation4], 0
    %s8 = scalar_lea.sflag [#allocation4], 1
    %9 = vsyncpa %s8, 0
    %10 = vsyncpa [#allocation6], 0
    loop: start=0, step=1, limit=4
    $region2: #{tpu_custom_call.1} parent=1 // loop_pre_header
      _
    $region3: #{tpu_custom_call.1} parent=1 // loop_header
      %s12 = sphi 0, %s16
      %p13 = scmp.ge.s32.totalorder %s12, 4
      %s19 = sphi 0, %s31
      %s20 = sphi 0, %s27
      %s21 = sphi 0, %s19
      %s22 = sphi 0, %s20
      %s23 = sphi 0, %s21
      %s24 = sphi 0, %s22
      %s36 = sphi 0, %s38
      %s39 = sphi 0, %s36
      %s40 = sphi 0, %s39
      %s56 = sphi 0, %s40
      %s62 = sphi 0, %s64
      %s65 = sphi 0, %s62
      %s66 = sphi 0, %s65
      %s82 = sphi 0, %s66
      %s88 = sphi 0, %s90
      %s91 = sphi 0, %s88
      %s92 = sphi 0, %s91
      %s108 = sphi 0, %s92
    $region4: #{tpu_custom_call.1} parent=1 // loop_header_branch
      %15 = sbr.rel (%p13) target = $region8
    $region5: #{tpu_custom_call.1} parent=1 // loop_body
      %s17 = ssub.s32 %s12, 1
      %s18 = ssub.s32 %s12, 2
      %s25 = sadd.s32 1, %s20
      %p26 = scmp.ge.s32.totalorder %s25, 1
      %s27 = scalar_select %p26, 0, %s25
      %s28 = sadd.s32 1, %s19
      %s29 = scalar_select %p26, %s28, %s19
      %p30 = scmp.ge.s32.totalorder %s29, 2
      %s31 = scalar_select %p30, 0, %s29
      %s32 = ssub.s32 %s19, %s31
      %s33 = ssub.s32 %s20, %s27
      %s34 = sor.u32 %s32, %s33
      %p35 = scmp.eq.s32.totalorder %s34, 0
      %s37 = sadd.s32 %s36, 1
      %s38 = scalar_select %p35, %s36, %s37
      %p41 = pneg %p35
      %p42 = scmp.eq.s32.totalorder %s12, 1
      %p43 = por %p41, %p42
      %p44 = scmp.ne.s32.totalorder %s36, %s39
      %p45 = scmp.eq.s32.totalorder %s12, 0
      %p46 = por %p44, %p45
      %p47 = scmp.ne.s32.totalorder %s36, %s39
      %p48 = scmp.eq.s32.totalorder %s17, 1
      %p49 = por %p47, %p48
      %p50 = scmp.ne.s32.totalorder %s39, %s40
      %p51 = scmp.eq.s32.totalorder %s17, 0
      %p52 = por %p50, %p51
      %p53 = scmp.ne.s32.totalorder %s39, %s40
      %p54 = scmp.eq.s32.totalorder %s18, 1
      %p55 = por %p53, %p54
      %p57 = scmp.ne.s32.totalorder %s40, %s56
      %p58 = scmp.eq.s32.totalorder %s18, 0
      %p59 = por %p57, %p58
      %s60 = ssub.s32 %s20, %s27
      %p61 = scmp.eq.s32.totalorder %s60, 0
      %s63 = sadd.s32 %s62, 1
      %s64 = scalar_select %p61, %s62, %s63
      %p67 = pneg %p61
      %p68 = scmp.eq.s32.totalorder %s12, 1
      %p69 = por %p67, %p68
      %p70 = scmp.ne.s32.totalorder %s62, %s65
      %p71 = scmp.eq.s32.totalorder %s12, 0
      %p72 = por %p70, %p71
      %p73 = scmp.ne.s32.totalorder %s62, %s65
      %p74 = scmp.eq.s32.totalorder %s17, 1
      %p75 = por %p73, %p74
      %p76 = scmp.ne.s32.totalorder %s65, %s66
      %p77 = scmp.eq.s32.totalorder %s17, 0
      %p78 = por %p76, %p77
      %p79 = scmp.ne.s32.totalorder %s65, %s66
      %p80 = scmp.eq.s32.totalorder %s18, 1
      %p81 = por %p79, %p80
      %p83 = scmp.ne.s32.totalorder %s66, %s82
      %p84 = scmp.eq.s32.totalorder %s18, 0
      %p85 = por %p83, %p84
      %s86 = ssub.s32 %s19, %s31
      %p87 = scmp.eq.s32.totalorder %s86, 0
      %s89 = sadd.s32 %s88, 1
      %s90 = scalar_select %p87, %s88, %s89
      %p93 = pneg %p87
      %p94 = scmp.eq.s32.totalorder %s12, 1
      %p95 = por %p93, %p94
      %p96 = scmp.ne.s32.totalorder %s88, %s91
      %p97 = scmp.eq.s32.totalorder %s12, 0
      %p98 = por %p96, %p97
      %p99 = scmp.ne.s32.totalorder %s88, %s91
      %p100 = scmp.eq.s32.totalorder %s17, 1
      %p101 = por %p99, %p100
      %p102 = scmp.ne.s32.totalorder %s91, %s92
      %p103 = scmp.eq.s32.totalorder %s17, 0
      %p104 = por %p102, %p103
      %p105 = scmp.ne.s32.totalorder %s91, %s92
      %p106 = scmp.eq.s32.totalorder %s18, 1
      %p107 = por %p105, %p106
      %p109 = scmp.ne.s32.totalorder %s92, %s108
      %p110 = scmp.eq.s32.totalorder %s18, 0
      %p111 = por %p109, %p110
      %p112 = scmp.le.s32.totalorder 1, %s12
      %p113 = scmp.lt.s32.totalorder %s12, 3
      %p114 = pnand %p112, %p113
      %p115 = pneg %p114
      // Predicated region
      $region9: #{tpu_custom_call.1} parent=5 // pred_check
        _
      $region10: #{tpu_custom_call.1} parent=5 // pred_check_branch
        %117 = sbr.rel (%p114) target = $region12
      $region11: #{tpu_custom_call.1} parent=5 // pred_region
        %s118 = ssub.s32 %s12, 1
        // Predicated region
        $region13: #{tpu_custom_call.1} parent=11 // pred_check
          %p119 = pneg %p78
        $region14: #{tpu_custom_call.1} parent=11 // pred_check_branch
          %121 = sbr.rel (%p119) target = $region16
        $region15: #{tpu_custom_call.1} parent=11 // pred_region
          %s122 = smul.u32 64, %s22
          %s124 = ssub.s32 1024, 1024
          %125 = vsyncadd [#allocation6], %s124
          %s126 = smul.addr %s122, 16
          %s127 = scalar_lea.hbm %s1, %s126
          %s129 = sshll.u32 [#allocation5], 4
          %s130 = int_to_ptr.vmem [resolvable:$true] %s129
          %132 = dma.hbm_to_vmem [thread:$0]  %s127, 1024, %s130, [#allocation6]
        $region16: #{tpu_custom_call.1} parent=11 // pred_fallthru
          _
      $region12: #{tpu_custom_call.1} parent=5 // pred_fallthru
        _
      %p133 = scmp.lt.s32.totalorder %s12, 2
      // Predicated region
      $region17: #{tpu_custom_call.1} parent=5 // pred_check
        %p134 = pneg %p133
      $region18: #{tpu_custom_call.1} parent=5 // pred_check_branch
        %136 = sbr.rel (%p134) target = $region20
      $region19: #{tpu_custom_call.1} parent=5 // pred_region
        // Predicated region
        $region21: #{tpu_custom_call.1} parent=19 // pred_check
          %p137 = pneg %p46
        $region22: #{tpu_custom_call.1} parent=19 // pred_check_branch
          %139 = sbr.rel (%p137) target = $region24
        $region23: #{tpu_custom_call.1} parent=19 // pred_region
          %s140 = sand.u32 %s36, 1
          %s141 = scalar_lea.sflag [#allocation4], %s140
          %s142 = sand.u32 %s36, 1
          %s143 = smul.addr %s142, 512
          %s144 = scalar_lea.vmem [#allocation3], %s143
          %s145 = smul.u32 64, %s20
          %s147 = ssub.s32 8192, 8192
          %148 = vsyncadd %s141, %s147
          %s149 = smul.addr %s19, 64
          %s150 = sadd.s32 %s145, %s149
          %s151 = smul.addr %s150, 128
          %s152 = scalar_lea.hbm %s0, %s151
          %s154 = sshll.u32 %s144, 4
          %s155 = int_to_ptr.vmem [resolvable:$true] %s154
          %157 = dma.hbm_to_vmem [thread:$0]  %s152, 8192, %s155, %s141
        $region24: #{tpu_custom_call.1} parent=19 // pred_fallthru
          _
      $region20: #{tpu_custom_call.1} parent=5 // pred_fallthru
        _
      %p158 = scmp.le.s32.totalorder 1, %s12
      %p159 = scmp.lt.s32.totalorder %s12, 3
      %p160 = pnand %p158, %p159
      %p161 = pneg %p160
      // Predicated region
      $region25: #{tpu_custom_call.1} parent=5 // pred_check
        _
      $region26: #{tpu_custom_call.1} parent=5 // pred_check_branch
        %163 = sbr.rel (%p160) target = $region28
      $region27: #{tpu_custom_call.1} parent=5 // pred_region
        %s164 = ssub.s32 %s12, 1
        %s165 = sand.u32 %s39, 1
        %s166 = scalar_lea.sflag [#allocation4], %s165
        %s167 = sand.u32 %s39, 1
        %s168 = smul.addr %s167, 512
        %s169 = scalar_lea.vmem [#allocation3], %s168
        // Predicated region
        $region29: #{tpu_custom_call.1} parent=27 // pred_check
          %p170 = pneg %p52
        $region30: #{tpu_custom_call.1} parent=27 // pred_check_branch
          %172 = sbr.rel (%p170) target = $region32
        $region31: #{tpu_custom_call.1} parent=27 // pred_region
          %173 = dma.done %s166, 8192
        $region32: #{tpu_custom_call.1} parent=27 // pred_fallthru
          _
        // Predicated region
        $region33: #{tpu_custom_call.1} parent=27 // pred_check
          %p174 = pneg %p78
        $region34: #{tpu_custom_call.1} parent=27 // pred_check_branch
          %176 = sbr.rel (%p174) target = $region36
        $region35: #{tpu_custom_call.1} parent=27 // pred_region
          %177 = dma.done [#allocation6], 1024
        $region36: #{tpu_custom_call.1} parent=27 // pred_fallthru
          _
        %s178 = sand.u32 %s39, 1
        %s179 = scalar_lea.sflag [#allocation4], %s178
        %s180 = sand.u32 %s39, 1
        %s181 = smul.addr %s180, 512
        %s182 = scalar_lea.vmem [#allocation3], %s181
        %p183 = pneg %p52
        %p184 = pneg %p49
        %p185 = pneg %p78
        %p186 = pneg %p75
        %p187 = pneg %p104
        %p188 = pneg %p101
        %p189 = scmp.lt.s32.totalorder %s21, 1
        %s190 = scalar_select %p189, %s21, 1
        %s191 = smul.addr %s190, 8
        %s192 = scalar_lea.vmem %s2, %s191
        %s193 = smul.u32 64, %s22
        %s194 = smul.u32 64, %s22
        %p195 = scmp.lt.s32.totalorder %s21, 1
        %s196 = scalar_select %p195, %s21, 1
        %s197 = smul.addr %s196, 8
        %s198 = scalar_lea.vmem %s2, %s197
        %p199 = scmp.eq.s32.totalorder %s22, 0
        // Predicated region
        $region37: #{tpu_custom_call.1} parent=27 // pred_check
          %p200 = pneg %p199
        $region38: #{tpu_custom_call.1} parent=27 // pred_check_branch
          %202 = sbr.rel (%p200) target = $region40
        $region39: #{tpu_custom_call.1} parent=27 // pred_region
          %vm203 = vcmask 7168
          %204 = vst.msk [vmem:[#allocation2] sm:$0xff] %vm203, 0.0
        $region40: #{tpu_custom_call.1} parent=27 // pred_fallthru
          _
        %v205 = vld [vmem:[%s169] sm:$0xff]
        %v206 = vld [vmem:[%s169 + $0x8] sm:$0xff]
        %v207 = vld [vmem:[%s169 + $0x10] sm:$0xff]
        %v208 = vld [vmem:[%s169 + $0x18] sm:$0xff]
        %v209 = vld [vmem:[%s169 + $0x20] sm:$0xff]
        %v210 = vld [vmem:[%s169 + $0x28] sm:$0xff]
        %v211 = vld [vmem:[%s169 + $0x30] sm:$0xff]
        %v212 = vld [vmem:[%s169 + $0x38] sm:$0xff]
        %v213 = vld [vmem:[%s169 + $0x40] sm:$0xff]
        %v214 = vld [vmem:[%s169 + $0x48] sm:$0xff]
        %v215 = vld [vmem:[%s169 + $0x50] sm:$0xff]
        %v216 = vld [vmem:[%s169 + $0x58] sm:$0xff]
        %v217 = vld [vmem:[%s169 + $0x60] sm:$0xff]
        %v218 = vld [vmem:[%s169 + $0x68] sm:$0xff]
        %v219 = vld [vmem:[%s169 + $0x70] sm:$0xff]
        %v220 = vld [vmem:[%s169 + $0x78] sm:$0xff]
        %v221 = vld [vmem:[%s169 + $0x80] sm:$0xff]
        %v222 = vld [vmem:[%s169 + $0x88] sm:$0xff]
        %v223 = vld [vmem:[%s169 + $0x90] sm:$0xff]
        %v224 = vld [vmem:[%s169 + $0x98] sm:$0xff]
        %v225 = vld [vmem:[%s169 + $0xa0] sm:$0xff]
        %v226 = vld [vmem:[%s169 + $0xa8] sm:$0xff]
        %v227 = vld [vmem:[%s169 + $0xb0] sm:$0xff]
        %v228 = vld [vmem:[%s169 + $0xb8] sm:$0xff]
        %v229 = vld [vmem:[%s169 + $0xc0] sm:$0xff]
        %v230 = vld [vmem:[%s169 + $0xc8] sm:$0xff]
        %v231 = vld [vmem:[%s169 + $0xd0] sm:$0xff]
        %v232 = vld [vmem:[%s169 + $0xd8] sm:$0xff]
        %v233 = vld [vmem:[%s169 + $0xe0] sm:$0xff]
        %v234 = vld [vmem:[%s169 + $0xe8] sm:$0xff]
        %v235 = vld [vmem:[%s169 + $0xf0] sm:$0xff]
        %v236 = vld [vmem:[%s169 + $0xf8] sm:$0xff]
        %v237 = vld [vmem:[%s169 + $0x100] sm:$0xff]
        %v238 = vld [vmem:[%s169 + $0x108] sm:$0xff]
        %v239 = vld [vmem:[%s169 + $0x110] sm:$0xff]
        %v240 = vld [vmem:[%s169 + $0x118] sm:$0xff]
        %v241 = vld [vmem:[%s169 + $0x120] sm:$0xff]
        %v242 = vld [vmem:[%s169 + $0x128] sm:$0xff]
        %v243 = vld [vmem:[%s169 + $0x130] sm:$0xff]
        %v244 = vld [vmem:[%s169 + $0x138] sm:$0xff]
        %v245 = vld [vmem:[%s169 + $0x140] sm:$0xff]
        %v246 = vld [vmem:[%s169 + $0x148] sm:$0xff]
        %v247 = vld [vmem:[%s169 + $0x150] sm:$0xff]
        %v248 = vld [vmem:[%s169 + $0x158] sm:$0xff]
        %v249 = vld [vmem:[%s169 + $0x160] sm:$0xff]
        %v250 = vld [vmem:[%s169 + $0x168] sm:$0xff]
        %v251 = vld [vmem:[%s169 + $0x170] sm:$0xff]
        %v252 = vld [vmem:[%s169 + $0x178] sm:$0xff]
        %v253 = vld [vmem:[%s169 + $0x180] sm:$0xff]
        %v254 = vld [vmem:[%s169 + $0x188] sm:$0xff]
        %v255 = vld [vmem:[%s169 + $0x190] sm:$0xff]
        %v256 = vld [vmem:[%s169 + $0x198] sm:$0xff]
        %v257 = vld [vmem:[%s169 + $0x1a0] sm:$0xff]
        %v258 = vld [vmem:[%s169 + $0x1a8] sm:$0xff]
        %v259 = vld [vmem:[%s169 + $0x1b0] sm:$0xff]
        %v260 = vld [vmem:[%s169 + $0x1b8] sm:$0xff]
        %v261 = vld [vmem:[%s169 + $0x1c0] sm:$0xff]
        %v262 = vld [vmem:[%s169 + $0x1c8] sm:$0xff]
        %v263 = vld [vmem:[%s169 + $0x1d0] sm:$0xff]
        %v264 = vld [vmem:[%s169 + $0x1d8] sm:$0xff]
        %v265 = vld [vmem:[%s169 + $0x1e0] sm:$0xff]
        %v266 = vld [vmem:[%s169 + $0x1e8] sm:$0xff]
        %v267 = vld [vmem:[%s169 + $0x1f0] sm:$0xff]
        %v268 = vld [vmem:[%s169 + $0x1f8] sm:$0xff]
        %v269 = vld [vmem:[#allocation5] sm:$0xff]
        %v270 = vld [vmem:[#allocation5 + $0x8] sm:$0xff]
        %v271 = vld [vmem:[#allocation5 + $0x10] sm:$0xff]
        %v272 = vld [vmem:[#allocation5 + $0x18] sm:$0xff]
        %v273 = vld [vmem:[#allocation5 + $0x20] sm:$0xff]
        %v274 = vld [vmem:[#allocation5 + $0x28] sm:$0xff]
        %v275 = vld [vmem:[#allocation5 + $0x30] sm:$0xff]
        %v276 = vld [vmem:[#allocation5 + $0x38] sm:$0xff]
        %v285 = vlaneseq
        %v286 = vshrl.u32 %v285, 7
        %v287 = vsub.s32 0, %v286
        %v288 = vrot.slane %v269, %v287
        %v289 = vlaneseq
        %v290 = vshrl.u32 %v289, 7
        %v291 = vsub.s32 1, %v290
        %v292 = vrot.slane %v269, %v291
        %v293 = vlaneseq
        %v294 = vshrl.u32 %v293, 7
        %v295 = vsub.s32 2, %v294
        %v296 = vrot.slane %v269, %v295
        %v297 = vlaneseq
        %v298 = vshrl.u32 %v297, 7
        %v299 = vsub.s32 3, %v298
        %v300 = vrot.slane %v269, %v299
        %v301 = vlaneseq
        %v302 = vshrl.u32 %v301, 7
        %v303 = vsub.s32 4, %v302
        %v304 = vrot.slane %v269, %v303
        %v305 = vlaneseq
        %v306 = vshrl.u32 %v305, 7
        %v307 = vsub.s32 5, %v306
        %v308 = vrot.slane %v269, %v307
        %v309 = vlaneseq
        %v310 = vshrl.u32 %v309, 7
        %v311 = vsub.s32 6, %v310
        %v312 = vrot.slane %v269, %v311
        %v313 = vlaneseq
        %v314 = vshrl.u32 %v313, 7
        %v315 = vsub.s32 7, %v314
        %v316 = vrot.slane %v269, %v315
        %v317 = vlaneseq
        %v318 = vshrl.u32 %v317, 7
        %v319 = vsub.s32 0, %v318
        %v320 = vrot.slane %v270, %v319
        %v321 = vlaneseq
        %v322 = vshrl.u32 %v321, 7
        %v323 = vsub.s32 1, %v322
        %v324 = vrot.slane %v270, %v323
        %v325 = vlaneseq
        %v326 = vshrl.u32 %v325, 7
        %v327 = vsub.s32 2, %v326
        %v328 = vrot.slane %v270, %v327
        %v329 = vlaneseq
        %v330 = vshrl.u32 %v329, 7
        %v331 = vsub.s32 3, %v330
        %v332 = vrot.slane %v270, %v331
        %v333 = vlaneseq
        %v334 = vshrl.u32 %v333, 7
        %v335 = vsub.s32 4, %v334
        %v336 = vrot.slane %v270, %v335
        %v337 = vlaneseq
        %v338 = vshrl.u32 %v337, 7
        %v339 = vsub.s32 5, %v338
        %v340 = vrot.slane %v270, %v339
        %v341 = vlaneseq
        %v342 = vshrl.u32 %v341, 7
        %v343 = vsub.s32 6, %v342
        %v344 = vrot.slane %v270, %v343
        %v345 = vlaneseq
        %v346 = vshrl.u32 %v345, 7
        %v347 = vsub.s32 7, %v346
        %v348 = vrot.slane %v270, %v347
        %v349 = vlaneseq
        %v350 = vshrl.u32 %v349, 7
        %v351 = vsub.s32 0, %v350
        %v352 = vrot.slane %v271, %v351
        %v353 = vlaneseq
        %v354 = vshrl.u32 %v353, 7
        %v355 = vsub.s32 1, %v354
        %v356 = vrot.slane %v271, %v355
        %v357 = vlaneseq
        %v358 = vshrl.u32 %v357, 7
        %v359 = vsub.s32 2, %v358
        %v360 = vrot.slane %v271, %v359
        %v361 = vlaneseq
        %v362 = vshrl.u32 %v361, 7
        %v363 = vsub.s32 3, %v362
        %v364 = vrot.slane %v271, %v363
        %v365 = vlaneseq
        %v366 = vshrl.u32 %v365, 7
        %v367 = vsub.s32 4, %v366
        %v368 = vrot.slane %v271, %v367
        %v369 = vlaneseq
        %v370 = vshrl.u32 %v369, 7
        %v371 = vsub.s32 5, %v370
        %v372 = vrot.slane %v271, %v371
        %v373 = vlaneseq
        %v374 = vshrl.u32 %v373, 7
        %v375 = vsub.s32 6, %v374
        %v376 = vrot.slane %v271, %v375
        %v377 = vlaneseq
        %v378 = vshrl.u32 %v377, 7
        %v379 = vsub.s32 7, %v378
        %v380 = vrot.slane %v271, %v379
        %v381 = vlaneseq
        %v382 = vshrl.u32 %v381, 7
        %v383 = vsub.s32 0, %v382
        %v384 = vrot.slane %v272, %v383
        %v385 = vlaneseq
        %v386 = vshrl.u32 %v385, 7
        %v387 = vsub.s32 1, %v386
        %v388 = vrot.slane %v272, %v387
        %v389 = vlaneseq
        %v390 = vshrl.u32 %v389, 7
        %v391 = vsub.s32 2, %v390
        %v392 = vrot.slane %v272, %v391
        %v393 = vlaneseq
        %v394 = vshrl.u32 %v393, 7
        %v395 = vsub.s32 3, %v394
        %v396 = vrot.slane %v272, %v395
        %v397 = vlaneseq
        %v398 = vshrl.u32 %v397, 7
        %v399 = vsub.s32 4, %v398
        %v400 = vrot.slane %v272, %v399
        %v401 = vlaneseq
        %v402 = vshrl.u32 %v401, 7
        %v403 = vsub.s32 5, %v402
        %v404 = vrot.slane %v272, %v403
        %v405 = vlaneseq
        %v406 = vshrl.u32 %v405, 7
        %v407 = vsub.s32 6, %v406
        %v408 = vrot.slane %v272, %v407
        %v409 = vlaneseq
        %v410 = vshrl.u32 %v409, 7
        %v411 = vsub.s32 7, %v410
        %v412 = vrot.slane %v272, %v411
        %v413 = vlaneseq
        %v414 = vshrl.u32 %v413, 7
        %v415 = vsub.s32 0, %v414
        %v416 = vrot.slane %v273, %v415
        %v417 = vlaneseq
        %v418 = vshrl.u32 %v417, 7
        %v419 = vsub.s32 1, %v418
        %v420 = vrot.slane %v273, %v419
        %v421 = vlaneseq
        %v422 = vshrl.u32 %v421, 7
        %v423 = vsub.s32 2, %v422
        %v424 = vrot.slane %v273, %v423
        %v425 = vlaneseq
        %v426 = vshrl.u32 %v425, 7
        %v427 = vsub.s32 3, %v426
        %v428 = vrot.slane %v273, %v427
        %v429 = vlaneseq
        %v430 = vshrl.u32 %v429, 7
        %v431 = vsub.s32 4, %v430
        %v432 = vrot.slane %v273, %v431
        %v433 = vlaneseq
        %v434 = vshrl.u32 %v433, 7
        %v435 = vsub.s32 5, %v434
        %v436 = vrot.slane %v273, %v435
        %v437 = vlaneseq
        %v438 = vshrl.u32 %v437, 7
        %v439 = vsub.s32 6, %v438
        %v440 = vrot.slane %v273, %v439
        %v441 = vlaneseq
        %v442 = vshrl.u32 %v441, 7
        %v443 = vsub.s32 7, %v442
        %v444 = vrot.slane %v273, %v443
        %v445 = vlaneseq
        %v446 = vshrl.u32 %v445, 7
        %v447 = vsub.s32 0, %v446
        %v448 = vrot.slane %v274, %v447
        %v449 = vlaneseq
        %v450 = vshrl.u32 %v449, 7
        %v451 = vsub.s32 1, %v450
        %v452 = vrot.slane %v274, %v451
        %v453 = vlaneseq
        %v454 = vshrl.u32 %v453, 7
        %v455 = vsub.s32 2, %v454
        %v456 = vrot.slane %v274, %v455
        %v457 = vlaneseq
        %v458 = vshrl.u32 %v457, 7
        %v459 = vsub.s32 3, %v458
        %v460 = vrot.slane %v274, %v459
        %v461 = vlaneseq
        %v462 = vshrl.u32 %v461, 7
        %v463 = vsub.s32 4, %v462
        %v464 = vrot.slane %v274, %v463
        %v465 = vlaneseq
        %v466 = vshrl.u32 %v465, 7
        %v467 = vsub.s32 5, %v466
        %v468 = vrot.slane %v274, %v467
        %v469 = vlaneseq
        %v470 = vshrl.u32 %v469, 7
        %v471 = vsub.s32 6, %v470
        %v472 = vrot.slane %v274, %v471
        %v473 = vlaneseq
        %v474 = vshrl.u32 %v473, 7
        %v475 = vsub.s32 7, %v474
        %v476 = vrot.slane %v274, %v475
        %v477 = vlaneseq
        %v478 = vshrl.u32 %v477, 7
        %v479 = vsub.s32 0, %v478
        %v480 = vrot.slane %v275, %v479
        %v481 = vlaneseq
        %v482 = vshrl.u32 %v481, 7
        %v483 = vsub.s32 1, %v482
        %v484 = vrot.slane %v275, %v483
        %v485 = vlaneseq
        %v486 = vshrl.u32 %v485, 7
        %v487 = vsub.s32 2, %v486
        %v488 = vrot.slane %v275, %v487
        %v489 = vlaneseq
        %v490 = vshrl.u32 %v489, 7
        %v491 = vsub.s32 3, %v490
        %v492 = vrot.slane %v275, %v491
        %v493 = vlaneseq
        %v494 = vshrl.u32 %v493, 7
        %v495 = vsub.s32 4, %v494
        %v496 = vrot.slane %v275, %v495
        %v497 = vlaneseq
        %v498 = vshrl.u32 %v497, 7
        %v499 = vsub.s32 5, %v498
        %v500 = vrot.slane %v275, %v499
        %v501 = vlaneseq
        %v502 = vshrl.u32 %v501, 7
        %v503 = vsub.s32 6, %v502
        %v504 = vrot.slane %v275, %v503
        %v505 = vlaneseq
        %v506 = vshrl.u32 %v505, 7
        %v507 = vsub.s32 7, %v506
        %v508 = vrot.slane %v275, %v507
        %v509 = vlaneseq
        %v510 = vshrl.u32 %v509, 7
        %v511 = vsub.s32 0, %v510
        %v512 = vrot.slane %v276, %v511
        %v513 = vlaneseq
        %v514 = vshrl.u32 %v513, 7
        %v515 = vsub.s32 1, %v514
        %v516 = vrot.slane %v276, %v515
        %v517 = vlaneseq
        %v518 = vshrl.u32 %v517, 7
        %v519 = vsub.s32 2, %v518
        %v520 = vrot.slane %v276, %v519
        %v521 = vlaneseq
        %v522 = vshrl.u32 %v521, 7
        %v523 = vsub.s32 3, %v522
        %v524 = vrot.slane %v276, %v523
        %v525 = vlaneseq
        %v526 = vshrl.u32 %v525, 7
        %v527 = vsub.s32 4, %v526
        %v528 = vrot.slane %v276, %v527
        %v529 = vlaneseq
        %v530 = vshrl.u32 %v529, 7
        %v531 = vsub.s32 5, %v530
        %v532 = vrot.slane %v276, %v531
        %v533 = vlaneseq
        %v534 = vshrl.u32 %v533, 7
        %v535 = vsub.s32 6, %v534
        %v536 = vrot.slane %v276, %v535
        %v537 = vlaneseq
        %v538 = vshrl.u32 %v537, 7
        %v539 = vsub.s32 7, %v538
        %v540 = vrot.slane %v276, %v539
        %v605 = vmul.f32 %v205, %v288
        %v606 = vmul.f32 %v206, %v292
        %v607 = vmul.f32 %v207, %v296
        %v608 = vmul.f32 %v208, %v300
        %v609 = vmul.f32 %v209, %v304
        %v610 = vmul.f32 %v210, %v308
        %v611 = vmul.f32 %v211, %v312
        %v612 = vmul.f32 %v212, %v316
        %v613 = vmul.f32 %v213, %v320
        %v614 = vmul.f32 %v214, %v324
        %v615 = vmul.f32 %v215, %v328
        %v616 = vmul.f32 %v216, %v332
        %v617 = vmul.f32 %v217, %v336
        %v618 = vmul.f32 %v218, %v340
        %v619 = vmul.f32 %v219, %v344
        %v620 = vmul.f32 %v220, %v348
        %v621 = vmul.f32 %v221, %v352
        %v622 = vmul.f32 %v222, %v356
        %v623 = vmul.f32 %v223, %v360
        %v624 = vmul.f32 %v224, %v364
        %v625 = vmul.f32 %v225, %v368
        %v626 = vmul.f32 %v226, %v372
        %v627 = vmul.f32 %v227, %v376
        %v628 = vmul.f32 %v228, %v380
        %v629 = vmul.f32 %v229, %v384
        %v630 = vmul.f32 %v230, %v388
        %v631 = vmul.f32 %v231, %v392
        %v632 = vmul.f32 %v232, %v396
        %v633 = vmul.f32 %v233, %v400
        %v634 = vmul.f32 %v234, %v404
        %v635 = vmul.f32 %v235, %v408
        %v636 = vmul.f32 %v236, %v412
        %v637 = vmul.f32 %v237, %v416
        %v638 = vmul.f32 %v238, %v420
        %v639 = vmul.f32 %v239, %v424
        %v640 = vmul.f32 %v240, %v428
        %v641 = vmul.f32 %v241, %v432
        %v642 = vmul.f32 %v242, %v436
        %v643 = vmul.f32 %v243, %v440
        %v644 = vmul.f32 %v244, %v444
        %v645 = vmul.f32 %v245, %v448
        %v646 = vmul.f32 %v246, %v452
        %v647 = vmul.f32 %v247, %v456
        %v648 = vmul.f32 %v248, %v460
        %v649 = vmul.f32 %v249, %v464
        %v650 = vmul.f32 %v250, %v468
        %v651 = vmul.f32 %v251, %v472
        %v652 = vmul.f32 %v252, %v476
        %v653 = vmul.f32 %v253, %v480
        %v654 = vmul.f32 %v254, %v484
        %v655 = vmul.f32 %v255, %v488
        %v656 = vmul.f32 %v256, %v492
        %v657 = vmul.f32 %v257, %v496
        %v658 = vmul.f32 %v258, %v500
        %v659 = vmul.f32 %v259, %v504
        %v660 = vmul.f32 %v260, %v508
        %v661 = vmul.f32 %v261, %v512
        %v662 = vmul.f32 %v262, %v516
        %v663 = vmul.f32 %v263, %v520
        %v664 = vmul.f32 %v264, %v524
        %v665 = vmul.f32 %v265, %v528
        %v666 = vmul.f32 %v266, %v532
        %v667 = vmul.f32 %v267, %v536
        %v668 = vmul.f32 %v268, %v540
        %v669 = vadd.f32 %v605, %v606
        %v670 = vadd.f32 %v669, %v607
        %v671 = vadd.f32 %v670, %v608
        %v672 = vadd.f32 %v671, %v609
        %v673 = vadd.f32 %v672, %v610
        %v674 = vadd.f32 %v673, %v611
        %v675 = vadd.f32 %v674, %v612
        %v676 = vadd.f32 %v675, %v613
        %v677 = vadd.f32 %v676, %v614
        %v678 = vadd.f32 %v677, %v615
        %v679 = vadd.f32 %v678, %v616
        %v680 = vadd.f32 %v679, %v617
        %v681 = vadd.f32 %v680, %v618
        %v682 = vadd.f32 %v681, %v619
        %v683 = vadd.f32 %v682, %v620
        %v684 = vadd.f32 %v683, %v621
        %v685 = vadd.f32 %v684, %v622
        %v686 = vadd.f32 %v685, %v623
        %v687 = vadd.f32 %v686, %v624
        %v688 = vadd.f32 %v687, %v625
        %v689 = vadd.f32 %v688, %v626
        %v690 = vadd.f32 %v689, %v627
        %v691 = vadd.f32 %v690, %v628
        %v692 = vadd.f32 %v691, %v629
        %v693 = vadd.f32 %v692, %v630
        %v694 = vadd.f32 %v693, %v631
        %v695 = vadd.f32 %v694, %v632
        %v696 = vadd.f32 %v695, %v633
        %v697 = vadd.f32 %v696, %v634
        %v698 = vadd.f32 %v697, %v635
        %v699 = vadd.f32 %v698, %v636
        %v700 = vadd.f32 %v699, %v637
        %v701 = vadd.f32 %v700, %v638
        %v702 = vadd.f32 %v701, %v639
        %v703 = vadd.f32 %v702, %v640
        %v704 = vadd.f32 %v703, %v641
        %v705 = vadd.f32 %v704, %v642
        %v706 = vadd.f32 %v705, %v643
        %v707 = vadd.f32 %v706, %v644
        %v708 = vadd.f32 %v707, %v645
        %v709 = vadd.f32 %v708, %v646
        %v710 = vadd.f32 %v709, %v647
        %v711 = vadd.f32 %v710, %v648
        %v712 = vadd.f32 %v711, %v649
        %v713 = vadd.f32 %v712, %v650
        %v714 = vadd.f32 %v713, %v651
        %v715 = vadd.f32 %v714, %v652
        %v716 = vadd.f32 %v715, %v653
        %v717 = vadd.f32 %v716, %v654
        %v718 = vadd.f32 %v717, %v655
        %v719 = vadd.f32 %v718, %v656
        %v720 = vadd.f32 %v719, %v657
        %v721 = vadd.f32 %v720, %v658
        %v722 = vadd.f32 %v721, %v659
        %v723 = vadd.f32 %v722, %v660
        %v724 = vadd.f32 %v723, %v661
        %v725 = vadd.f32 %v724, %v662
        %v726 = vadd.f32 %v725, %v663
        %v727 = vadd.f32 %v726, %v664
        %v728 = vadd.f32 %v727, %v665
        %v729 = vadd.f32 %v728, %v666
        %v730 = vadd.f32 %v729, %v667
        %v731 = vadd.f32 %v730, %v668
        %732 = vadd.xlane.f32.xlu0 %v731
        %v733 = vpop.xlane.xlu0 %732
        %v734 = vadd.f32 %v733, 0.0
        %v735 = vld [vmem:[#allocation2] sm:$0xff]
        %v736 = vadd.f32 %v735, %v734
        %vm737 = vcmask 7168
        %738 = vst.msk [vmem:[#allocation2] sm:$0xff] %vm737, %v736
        // Predicated region
        $region41: #{tpu_custom_call.1} parent=27 // pred_check
          %p739 = pneg %p199
        $region42: #{tpu_custom_call.1} parent=27 // pred_check_branch
          %741 = sbr.rel (%p739) target = $region44
        $region43: #{tpu_custom_call.1} parent=27 // pred_region
          %v742 = vld [vmem:[#allocation2] sm:$0xff]
          %743 = vst.msk [vmem:[%s198] sm:$0xff] %vm737, %v742
        $region44: #{tpu_custom_call.1} parent=27 // pred_fallthru
          _
        %p744 = scmp.lt.s32.totalorder %s21, 1
        %s745 = scalar_select %p744, %s21, 1
        %s746 = smul.addr %s745, 8
        %s747 = scalar_lea.vmem %s2, %s746
        // Predicated region
        $region45: #{tpu_custom_call.1} parent=27 // pred_check
          %p748 = pneg %p101
        $region46: #{tpu_custom_call.1} parent=27 // pred_check_branch
          %750 = sbr.rel (%p748) target = $region48
        $region47: #{tpu_custom_call.1} parent=27 // pred_region
          _
        $region48: #{tpu_custom_call.1} parent=27 // pred_fallthru
          _
      $region28: #{tpu_custom_call.1} parent=5 // pred_fallthru
        _
      %p751 = scmp.le.s32.totalorder 2, %s12
      // Predicated region
      $region49: #{tpu_custom_call.1} parent=5 // pred_check
        %p752 = pneg %p751
      $region50: #{tpu_custom_call.1} parent=5 // pred_check_branch
        %754 = sbr.rel (%p752) target = $region52
      $region51: #{tpu_custom_call.1} parent=5 // pred_region
        %s755 = ssub.s32 %s12, 2
        // Predicated region
        $region53: #{tpu_custom_call.1} parent=51 // pred_check
          %p756 = pneg %p107
        $region54: #{tpu_custom_call.1} parent=51 // pred_check_branch
          %758 = sbr.rel (%p756) target = $region56
        $region55: #{tpu_custom_call.1} parent=51 // pred_region
          %p759 = scmp.lt.s32.totalorder %s23, 1
          %s760 = scalar_select %p759, %s23, 1
          %s761 = smul.addr %s760, 8
          %s762 = scalar_lea.vmem %s2, %s761
        $region56: #{tpu_custom_call.1} parent=51 // pred_fallthru
          _
      $region52: #{tpu_custom_call.1} parent=5 // pred_fallthru
        _
    $region6: #{tpu_custom_call.1} parent=1 // loop_footer
      %s16 = sadd.s32 1, %s12
    $region7: #{tpu_custom_call.1} parent=1 // loop_footer_branch
      %11 = sbr.rel target = $region3
    $region8: #{tpu_custom_call.1} parent=1 // loop_exit
      _
    %763 = vsyncpa [#allocation4], 1
    %s764 = scalar_lea.sflag [#allocation4], 1
    %765 = vsyncpa %s764, 1
    %766 = vsyncpa [#allocation6], 1

</llo_original>
